<compile_context>
chip_gen: v6e
topology: v6e:2x2x1
jax: 0.10.0
libtpu: 0.0.40
codegen_flags: <defaults>
</compile_context>

<pallas_src>
import functools

import jax
import jax.numpy as jnp
from jax import lax
from jax.experimental import pallas as pl
from jax.experimental.pallas import tpu as pltpu


# ----------------------------------------------------------------------------
# Pallas kernel: lane-dense broadcast add of the (pre-normalized) embedding row
# ----------------------------------------------------------------------------
def _add_pos_kernel(x_ref, emb_ref, o_ref):
    # x_ref/o_ref: (bb, T*H) streaming tiles; emb_ref: (1, T*H) resident row,
    # sublane-broadcast over the bb batch rows. Purely HBM-bandwidth-bound.
    o_ref[...] = x_ref[...] + emb_ref[...]
    # Dropout: eval-mode identity.
    # TODO(synk): training-mode dropout mask via pltpu.prng_seed/prng_random_bits.


# ----------------------------------------------------------------------------
# Batch-invariant work (hoisted out of the streaming kernel, fused by XLA)
# ----------------------------------------------------------------------------
def _interp_endpoints(table: jax.Array, t: int):
    """(lo, hi, frac) s.t. emb = lo + frac*(hi-lo) is the align-corners linear
    interpolation of the embedding table to t buckets."""
    max_buckets = table.shape[0]
    if t == max_buckets:
        frac = jnp.zeros((t, 1), jnp.float32)
        return table, table, frac
    if t == 1:
        pos = jnp.zeros((1,), jnp.float32)
    else:
        pos = jnp.arange(t, dtype=jnp.float32) * ((max_buckets - 1) / (t - 1))
    lo_idx = jnp.floor(pos).astype(jnp.int32)
    hi_idx = jnp.minimum(lo_idx + 1, max_buckets - 1)
    frac = (pos - lo_idx.astype(jnp.float32)).reshape(t, 1)
    return table[lo_idx], table[hi_idx], frac


def _embed_layernorm(embedding_table, t, ln_gamma, ln_beta, eps):
    """Interpolated positional embedding, LayerNormed over hidden (f32)."""
    lo, hi, frac = _interp_endpoints(embedding_table.astype(jnp.float32), t)
    emb = lo + frac * (hi - lo)                              # [T, H]
    mean = jnp.mean(emb, axis=-1, keepdims=True)
    centered = emb - mean
    var = jnp.mean(centered * centered, axis=-1, keepdims=True)
    normed = centered * lax.rsqrt(var + eps)
    return normed * ln_gamma.astype(jnp.float32) + ln_beta.astype(jnp.float32)


# ----------------------------------------------------------------------------
# Generation-aware tiling
# ----------------------------------------------------------------------------
_TARGET_TILE_BYTES = 8 * 1024 * 1024   # ~8 MiB input tile: 85-90% HBM roofline


def _tpu_generation_defaults():
    """(TensorCores sharing the grid, vmem_limit_bytes) for the local chip."""
    try:
        kind = jax.devices()[0].device_kind.lower()
    except Exception:
        kind = ""
    if "v7" in kind:
        return 2, 48 * 1024 * 1024     # v7x: 2 TCs/chip, only 64 MiB physical VMEM
    return 1, 64 * 1024 * 1024         # v5e/v6e (and older): 1 TC, 128 MiB VMEM


def _choose_block_batch(B, T, H, dtype_bytes, vmem_budget_bytes, num_tensorcores):
    """Batch rows per grid step for the (B, T*H) streaming add."""
    row_bytes = max(1, T * H * dtype_bytes)
    # Sublane packing multiple for the second-to-last block dim.
    sub = 8 if dtype_bytes >= 4 else (16 if dtype_bytes == 2 else 32)

    # VMEM cap: input + output tiles, each double-buffered by the pipeline
    # (4 tiles), plus the small resident emb row (double-buffered).
    bb_vmem = max(1, (vmem_budget_bytes - 2 * row_bytes) // (4 * row_bytes))
    # Byte-based target tile size (replaces the old row-count heuristic).
    bb_target = max(1, _TARGET_TILE_BYTES // row_bytes)
    bb_cap = min(bb_vmem, bb_target)

    # Whole batch in one block when it fits and there is no second TensorCore
    # to feed (or the batch is too small to split into sublane-aligned halves).
    if B <= bb_cap and (num_tensorcores <= 1 or B < 2 * sub):
        return B

    # Pick the number of grid steps; on 2-TC chips keep it even so both cores
    # get equal work under dimension_semantics=("parallel",).
    steps = pl.cdiv(B, bb_cap)
    if num_tensorcores > 1:
        steps = max(steps, 2)
        if steps % 2:
            steps += 1

    bb = pl.cdiv(B, steps)
    bb = ((bb + sub - 1) // sub) * sub          # round up to the packing multiple
    bb = max(1, min(bb, bb_cap, B))             # re-clamp AFTER rounding (VMEM safe)
    if bb != B and bb % sub != 0 and bb > sub:
        bb = (bb // sub) * sub                  # keep the (8,128) block-shape rule

    # Prefer a nearby block that divides B exactly (no short masked tail block)
    # while staying sublane-aligned and keeping the even-step rule on 2-TC chips.
    for cand in range(bb, max(bb - 4 * sub, 0), -1):
        if B % cand != 0:
            continue
        if cand % sub != 0 and cand != B:
            continue
        if num_tensorcores > 1 and pl.cdiv(B, cand) % 2 != 0:
            continue
        return cand
    return bb


# ----------------------------------------------------------------------------
# Public wrapper (single jit: lerp + LayerNorm fuse in front of the kernel)
# ----------------------------------------------------------------------------
@functools.partial(
    jax.jit,
    static_argnames=("dimensions", "eps", "vmem_limit_bytes", "in_place"))
def temporal_position_encoder(inputs: jax.Array,
                              dimensions,                      # (h, t, w), static
                              *,
                              embedding_table: jax.Array,      # [max_buckets, H]
                              ln_gamma: jax.Array,             # [H]
                              ln_beta: jax.Array,              # [H]
                              eps: float = 1e-6,
                              vmem_limit_bytes: int | None = None,
                              in_place: bool = False) -> jax.Array:
    _, t, _ = dimensions
    B, T, H = inputs.shape
    assert T == t, "inputs temporal axis must match dimensions[1]"

    # --- batch-invariant work (runs once per call, tiny fusion) --------------
    emb_ln = _embed_layernorm(embedding_table, t, ln_gamma, ln_beta, eps)
    emb_ln = emb_ln.astype(inputs.dtype).reshape(1, T * H)     # lane-dense row

    # --- generation-aware VMEM / tiling knobs (single source of truth) -------
    num_tc, default_limit = _tpu_generation_defaults()
    if vmem_limit_bytes is None:
        vmem_limit_bytes = default_limit
    vmem_budget_bytes = max(1 << 20, int(vmem_limit_bytes * 0.85))  # headroom

    # --- lane-dense streaming broadcast-add over (B, T*H) --------------------
    x2 = inputs.reshape(B, T * H)
    dtype_bytes = jnp.dtype(inputs.dtype).itemsize
    bb = _choose_block_batch(B, T, H, dtype_bytes, vmem_budget_bytes, num_tc)
    grid = (pl.cdiv(B, bb),)

    out2 = pl.pallas_call(
        _add_pos_kernel,
        out_shape=jax.ShapeDtypeStruct((B, T * H), inputs.dtype),
        grid_spec=pltpu.PrefetchScalarGridSpec(
            num_scalar_prefetch=0,
            grid=grid,
            in_specs=[
                pl.BlockSpec((bb, T * H), lambda i: (i, 0)),   # inputs (streamed)
                pl.BlockSpec((1, T * H), lambda i: (0, 0)),    # emb_ln (resident)
            ],
            out_specs=pl.BlockSpec((bb, T * H), lambda i: (i, 0)),
        ),
        # In-place add (no second B*T*H HBM buffer) for callers that donate
        # the activation buffer at their own jit boundary.
        input_output_aliases={0: 0} if in_place else {},
        compiler_params=pltpu.CompilerParams(
            dimension_semantics=("parallel",),
            vmem_limit_bytes=vmem_limit_bytes),
    )(x2, emb_ln)

    return out2.reshape(B, T, H)


# ----------------------------------------------------------------------------
# Pure-JAX reference for verification
# ----------------------------------------------------------------------------
def _reference(inputs, dimensions, embedding_table, ln_gamma, ln_beta, eps):
    _, t, _ = dimensions
    emb = _embed_layernorm(embedding_table, t, ln_gamma, ln_beta, eps)
    return inputs + emb[None].astype(inputs.dtype)   # dropout identity (eval)


if __name__ == "__main__":
    # Config: max_temporal_buckets=16, hidden_size=128, epsilon=1e-6, dropout=0.0
    B, T, H = 2, 8, 128
    MAX_BUCKETS = 16
    EPS = 1e-6
    dimensions = (4, T, 4)   # (h, t, w) -- only t is used

    key = jax.random.PRNGKey(0)
    k_x, k_emb, k_g, k_b = jax.random.split(key, 4)

    x = jax.random.normal(k_x, (B, T, H), jnp.float32)
    embedding_table = jax.random.normal(k_emb, (MAX_BUCKETS, H), jnp.float32) * 0.02
    ln_gamma = 1.0 + 0.1 * jax.random.normal(k_g, (H,), jnp.float32)
    ln_beta = 0.1 * jax.random.normal(k_b, (H,), jnp.float32)

    out = temporal_position_encoder(
        x, dimensions,
        embedding_table=embedding_table,
        ln_gamma=ln_gamma, ln_beta=ln_beta, eps=EPS)
    out = jax.block_until_ready(out)

    ref = _reference(x, dimensions, embedding_table, ln_gamma, ln_beta, EPS)
    assert out.shape == (B, T, H)
    assert jnp.allclose(out, ref, atol=1e-5, rtol=1e-5), "mismatch vs reference"

    print("KERNEL_OK")
</pallas_src>

<mosaic_0001>
module attributes {stable_mosaic.version = 11 : i64} {
  func.func @_add_pos_kernel(%arg0: i32, %arg1: memref<2x1024xf32, #tpu.memory_space<vmem>>, %arg2: memref<1x1024xf32, #tpu.memory_space<vmem>>, %arg3: memref<2x1024xf32, #tpu.memory_space<vmem>>) attributes {dimension_semantics = [#tpu.dimension_semantics<parallel>], iteration_bounds = array<i64: 1>, scalar_prefetch = 0 : i64, scratch_operands = 0 : i64, tpu.core_type = #tpu.core_type<tc>, window_params = [{transform_indices = @transform_0, window_bounds = array<i64: 2, 1024>}, {pipeline_mode = #tpu.pipeline_mode<synchronous>, transform_indices = @transform_1, window_bounds = array<i64: 1, 1024>}, {transform_indices = @transform_2, window_bounds = array<i64: 2, 1024>}]} {
    %c0 = arith.constant 0 : index
    %c0_0 = arith.constant 0 : index
    %0 = vector.load %arg1[%c0, %c0_0] : memref<2x1024xf32, #tpu.memory_space<vmem>>, vector<2x1024xf32>
    %c0_1 = arith.constant 0 : index
    %c0_2 = arith.constant 0 : index
    %1 = vector.load %arg2[%c0_1, %c0_2] : memref<1x1024xf32, #tpu.memory_space<vmem>>, vector<1x1024xf32>
    %2 = vector.broadcast %1 : vector<1x1024xf32> to vector<2x1024xf32>
    %3 = arith.addf %0, %2 : vector<2x1024xf32>
    %c0_3 = arith.constant 0 : index
    %c0_4 = arith.constant 0 : index
    %4 = vector.load %arg3[%c0_3, %c0_4] : memref<2x1024xf32, #tpu.memory_space<vmem>>, vector<2x1024xf32>
    tpu.vector_store %arg3[%c0_3, %c0_4], %3 {strides = array<i32>} : memref<2x1024xf32, #tpu.memory_space<vmem>>, vector<2x1024xf32>,
    return
  }
  func.func @transform_0(%arg0: i32) -> (i32, i32) {
    %c0_i32 = arith.constant 0 : i32
    %c0_i32_0 = arith.constant 0 : i32
    return %arg0, %c0_i32 : i32, i32
  }
  func.func @transform_1(%arg0: i32) -> (i32, i32) {
    %c0_i32 = arith.constant 0 : i32
    %c0_i32_0 = arith.constant 0 : i32
    %c0_i32_1 = arith.constant 0 : i32
    return %c0_i32, %c0_i32_0 : i32, i32
  }
  func.func @transform_2(%arg0: i32) -> (i32, i32) {
    %c0_i32 = arith.constant 0 : i32
    %c0_i32_0 = arith.constant 0 : i32
    return %arg0, %c0_i32 : i32, i32
  }
}

</mosaic_0001>

<llo_original>
// kernel: temporal_position_encoder.1
$region0: #{temporal_position_encoder.1}
  #allocation0 [shape = 'u32[]', space=smem, size = 0x4, offset = 0x4, fixed_abs, tag = 'smem constant byte address 0x4 - core index']
  #allocation1 [shape = 'u32[144,128]{1,0:T(1,128)}', space=vmem, size = 0x12000, scoped, tag = 'internal scratch']
  %s0 = inlined_call_operand.vmem [shape: f32[2,1024], index: 0, kind: input, shape index: {}]
  %s1 = inlined_call_operand.vmem [shape: f32[1,1024], index: 1, kind: input, shape index: {}]
  %s2 = inlined_call_operand.vmem [shape: f32[2,1024], index: 2, kind: output, shape index: {}]
  %s3 = sld [smem:[#allocation0]]
  $region18: #{temporal_position_encoder.1} parent=0
    _
  %s5 = ssub.s32 1, %s3
  %s6 = scalar_select 0, %s5, %s3
  // Predicated region
  $region2: #{temporal_position_encoder.1} parent=0 // pred_check
    _
  $region3: #{temporal_position_encoder.1} parent=0 // pred_check_branch
    %8 = sbr.rel (0) target = $region5
  $region4: #{temporal_position_encoder.1} parent=0 // pred_region
    _
  $region5: #{temporal_position_encoder.1} parent=0 // pred_fallthru
    _
  // Predicated region
  $region6: #{temporal_position_encoder.1} parent=0 // pred_check
    _
  $region7: #{temporal_position_encoder.1} parent=0 // pred_check_branch
    %10 = sbr.rel (0) target = $region9
  $region8: #{temporal_position_encoder.1} parent=0 // pred_region
    _
  $region9: #{temporal_position_encoder.1} parent=0 // pred_fallthru
    _
  %v11 = vld [vmem:[%s0] sm:$0xff]
  %v12 = vld [vmem:[%s0 + $0x8] sm:$0xff]
  %v13 = vld [vmem:[%s1] sm:$0xff]
  %v15 = vlaneseq
  %v16 = vshrl.u32 %v15, 7
  %v17 = vsub.s32 0, %v16
  %v18 = vrot.slane %v13, %v17
  %v19 = vlaneseq
  %v20 = vshrl.u32 %v19, 7
  %v21 = vsub.s32 1, %v20
  %v22 = vrot.slane %v13, %v21
  %v23 = vlaneseq
  %v24 = vshrl.u32 %v23, 7
  %v25 = vsub.s32 2, %v24
  %v26 = vrot.slane %v13, %v25
  %v27 = vlaneseq
  %v28 = vshrl.u32 %v27, 7
  %v29 = vsub.s32 3, %v28
  %v30 = vrot.slane %v13, %v29
  %v31 = vlaneseq
  %v32 = vshrl.u32 %v31, 7
  %v33 = vsub.s32 4, %v32
  %v34 = vrot.slane %v13, %v33
  %v35 = vlaneseq
  %v36 = vshrl.u32 %v35, 7
  %v37 = vsub.s32 5, %v36
  %v38 = vrot.slane %v13, %v37
  %v39 = vlaneseq
  %v40 = vshrl.u32 %v39, 7
  %v41 = vsub.s32 6, %v40
  %v42 = vrot.slane %v13, %v41
  %v43 = vlaneseq
  %v44 = vshrl.u32 %v43, 7
  %v45 = vsub.s32 7, %v44
  %v46 = vrot.slane %v13, %v45
  %v47 = vcombine.low %v18, %v22
  %v48 = vcombine.low %v26, %v30
  %v50 = vunpack.c.l.s4 1983009808
  %v51 = vunpack.c.0.s8 %v50
  %v52 = vlaneseq
  %v53 = vshrl.u32 %v52, 7
  %v54 = vsub.s32 %v51, %v53
  %v55 = vrot.slane %v47, %v54
  %v57 = vunpack.c.l.s4 1983009808
  %v58 = vunpack.c.0.s8 %v57
  %v59 = vlaneseq
  %v60 = vshrl.u32 %v59, 7
  %v61 = vsub.s32 %v58, %v60
  %v62 = vrot.slane %v48, %v61
  %v63 = vcombine.low %v55, %v62
  %v64 = vcombine.low %v34, %v38
  %v65 = vcombine.low %v42, %v46
  %v67 = vunpack.c.l.s4 1983009808
  %v68 = vunpack.c.0.s8 %v67
  %v69 = vlaneseq
  %v70 = vshrl.u32 %v69, 7
  %v71 = vsub.s32 %v68, %v70
  %v72 = vrot.slane %v64, %v71
  %v74 = vunpack.c.l.s4 1983009808
  %v75 = vunpack.c.0.s8 %v74
  %v76 = vlaneseq
  %v77 = vshrl.u32 %v76, 7
  %v78 = vsub.s32 %v75, %v77
  %v79 = vrot.slane %v65, %v78
  %v80 = vcombine.low %v72, %v79
  %v83 = vadd.f32 %v11, %v63
  %v84 = vadd.f32 %v12, %v80
  %85 = vst [vmem:[%s2] sm:$0xff] %v83
  %86 = vst [vmem:[%s2 + $0x8] sm:$0xff] %v84
  // Predicated region
  $region10: #{temporal_position_encoder.1} parent=0 // pred_check
    _
  $region11: #{temporal_position_encoder.1} parent=0 // pred_check_branch
    %88 = sbr.rel (0) target = $region13
  $region12: #{temporal_position_encoder.1} parent=0 // pred_region
    _
  $region13: #{temporal_position_encoder.1} parent=0 // pred_fallthru
    _
  // Predicated region
  $region14: #{temporal_position_encoder.1} parent=0 // pred_check
    _
  $region15: #{temporal_position_encoder.1} parent=0 // pred_check_branch
    %90 = sbr.rel (0) target = $region17
  $region16: #{temporal_position_encoder.1} parent=0 // pred_region
    _
  $region17: #{temporal_position_encoder.1} parent=0 // pred_fallthru
    _

</llo_original>
